<compile_context>
chip_gen: v7x
topology: tpu7x:2x2x1
jax: 0.10.0
libtpu: 0.0.40
codegen_flags: <defaults>
</compile_context>

<pallas_src>
import functools

import jax
import jax.numpy as jnp
from jax.experimental import pallas as pl
from jax.experimental.pallas import tpu as pltpu


def _se_kernel_with_identity(x_ref, id_ref, w1_ref, w2_ref, o_ref, *, inv_hw):
    """out = x * sigmoid(relu(mean(x) @ W1) @ W2) + identity, one batch block.

    x_ref / id_ref / o_ref: (TB, C, HWp); w1_ref: (C, C_red); w2_ref: (C_red, C).
    """
    # Global average pool, accumulated in f32 without materializing a full
    # f32 copy of the (TB, C, HWp) block.  1/HW (unpadded) folded in here.
    pooled = jnp.sum(x_ref[...], axis=-1, dtype=jnp.float32) * inv_hw    # (TB, C)
    w1 = w1_ref[...].astype(jnp.float32)
    w2 = w2_ref[...].astype(jnp.float32)
    h = jnp.maximum(jnp.dot(pooled, w1, preferred_element_type=jnp.float32), 0.0)
    s = jax.nn.sigmoid(jnp.dot(h, w2, preferred_element_type=jnp.float32))  # (TB, C)
    # Gate + residual in the input dtype (halves vreg pressure for bf16
    # activations; on v5e keep activations f32 — the kernel is HBM-bound
    # there anyway and v5e has no native bf16 VALU).
    s = s.astype(o_ref.dtype)
    o_ref[...] = x_ref[...] * s[:, :, None] + id_ref[...]


def _se_kernel_self_residual(x_ref, w1_ref, w2_ref, o_ref, *, inv_hw):
    """identity == x: out = x * (s + 1); reads x from HBM only once."""
    pooled = jnp.sum(x_ref[...], axis=-1, dtype=jnp.float32) * inv_hw    # (TB, C)
    w1 = w1_ref[...].astype(jnp.float32)
    w2 = w2_ref[...].astype(jnp.float32)
    h = jnp.maximum(jnp.dot(pooled, w1, preferred_element_type=jnp.float32), 0.0)
    s = jax.nn.sigmoid(jnp.dot(h, w2, preferred_element_type=jnp.float32))
    gate = (s + 1.0).astype(o_ref.dtype)
    o_ref[...] = x_ref[...] * gate[:, :, None]


def _vmem_capacity_bytes():
    try:
        return int(pltpu.get_tpu_info().vmem_capacity_bytes)
    except Exception:
        return 64 << 20          # conservative: v7x per-TensorCore VMEM


def _choose_batch_tile(b, per_image_bytes, n_streams, vmem_cap):
    """Pick TB (images per grid step); returns a divisor of b."""
    # Fit the double-buffered data streams in ~60% of VMEM.
    max_block_bytes = max(per_image_bytes,
                          int(0.6 * vmem_cap) // (2 * n_streams))
    tb = max(1, max_block_bytes // per_image_bytes)
    # Target ~2 MiB per stream block to amortize the ~0.35 us per-step cost.
    tb = min(tb, max(1, (2 << 20) // per_image_bytes))
    # Keep >= min(B, 4) grid steps so the DMA pipeline has depth and the
    # "parallel" batch axis can be sharded across both TensorCores on v7x.
    tb = min(tb, max(1, b // min(b, 4)), b)
    while b % tb:                # snap down to a divisor: no masked edge block
        tb -= 1
    return max(tb, 1)


def se_block(x_nchw, identity_nchw, w1, w2, *, identity_is_x=False):
    """SEBlock forward: x * sigmoid(relu(avgpool(x) @ w1) @ w2) + identity.

    x_nchw, identity_nchw: (B, C, H, W).
    w1: (C, C_red) == fc1.weight.T ; w2: (C_red, C) == fc2.weight.T.
    Set identity_is_x=True (or pass identity_nchw=None) for the standard
    residual-on-x case: that path reads x from HBM only once.  The
    `identity is x` object test is also honoured, but it does not survive
    jit tracing, so prefer the explicit flag under jit.
    """
    b, c, h, w = x_nchw.shape
    hw = h * w
    c_red = w1.shape[1]
    dtype = x_nchw.dtype
    itemsize = jnp.dtype(dtype).itemsize

    self_residual = (identity_is_x or identity_nchw is None
                     or identity_nchw is x_nchw)

    x_flat = x_nchw.reshape(b, c, hw)
    if not self_residual:
        id_flat = identity_nchw.astype(dtype).reshape(b, c, hw)

    # Lane-dense layout: pad HW up to a multiple of 128 so stores are
    # unmasked vst (matters for 7x7 / 14x14 / 28x28 feature maps).  Padding
    # is zeros, so it contributes nothing to the pooled sum and the padded
    # output columns are sliced away afterwards.
    hw_pad = hw if hw % 128 == 0 else ((hw + 127) // 128) * 128
    if hw_pad != hw:
        pad = ((0, 0), (0, 0), (0, hw_pad - hw))
        x_flat = jnp.pad(x_flat, pad)
        if not self_residual:
            id_flat = jnp.pad(id_flat, pad)

    n_streams = 2 if self_residual else 3          # x (+identity) + out
    per_image_bytes = c * hw_pad * itemsize
    vmem_cap = _vmem_capacity_bytes()
    tb = _choose_batch_tile(b, per_image_bytes, n_streams, vmem_cap)
    n_steps = b // tb
    block_bytes = tb * per_image_bytes
    w_bytes = 2 * c * c_red * 4

    # Explicit VMEM budget derived from the actual double-buffered block
    # footprint; a block sized for v5e/v6e's 128 MiB would otherwise
    # spill / OOM on v7x's 64 MiB.
    need = 2 * n_streams * block_bytes + 2 * w_bytes + (4 << 20)
    vmem_limit = int(min(0.9 * vmem_cap, max(need, 32 << 20)))
    # TODO(synk): if a single image at TB=1 exceeds the VMEM budget
    # (e.g. C=512, HW=3136 in f32 on v7x), split into a pooling pass and a
    # gating pass over HW chunks instead of the whole-image block used here.

    data_spec = pl.BlockSpec((tb, c, hw_pad), lambda i: (i, 0, 0))
    w1_spec = pl.BlockSpec((c, c_red), lambda i: (0, 0))
    w2_spec = pl.BlockSpec((c_red, c), lambda i: (0, 0))

    cparams = pltpu.CompilerParams(
        dimension_semantics=("parallel",),
        vmem_limit_bytes=vmem_limit,
    )
    cost = pl.CostEstimate(
        flops=2 * b * c * c_red * 2 + 3 * b * c * hw,   # two tiny matmuls + pool/gate/add
        transcendentals=b * c,                          # sigmoid
        bytes_accessed=n_streams * b * c * hw * itemsize + w_bytes,
    )
    inv_hw = 1.0 / hw      # mean over the *unpadded* spatial extent

    if self_residual:
        out_flat = pl.pallas_call(
            functools.partial(_se_kernel_self_residual, inv_hw=inv_hw),
            out_shape=jax.ShapeDtypeStruct((b, c, hw_pad), dtype),
            grid=(n_steps,),
            in_specs=[data_spec, w1_spec, w2_spec],
            out_specs=data_spec,
            compiler_params=cparams,
            cost_estimate=cost,
        )(x_flat, w1, w2)
    else:
        out_flat = pl.pallas_call(
            functools.partial(_se_kernel_with_identity, inv_hw=inv_hw),
            out_shape=jax.ShapeDtypeStruct((b, c, hw_pad), dtype),
            grid=(n_steps,),
            in_specs=[data_spec, data_spec, w1_spec, w2_spec],
            out_specs=data_spec,
            compiler_params=cparams,
            cost_estimate=cost,
        )(x_flat, id_flat, w1, w2)

    if hw_pad != hw:
        out_flat = out_flat[:, :, :hw]
    return out_flat.reshape(b, c, h, w)


if __name__ == "__main__":
    # Small shapes consistent with the module defaults:
    # batch=8, channels=64, spatial=16x16, reduction=16 -> hidden=4.
    B, C, H, W = 8, 64, 16, 16
    REDUCTION = 16
    C_RED = C // REDUCTION

    key = jax.random.PRNGKey(0)
    kx, kid, kw1, kw2 = jax.random.split(key, 4)

    x = jax.random.normal(kx, (B, C, H, W), dtype=jnp.float32)
    identity = jax.random.normal(kid, (B, C, H, W), dtype=jnp.float32)

    # PyTorch Linear(C, C_red, bias=False) weight is (C_red, C); the kernel
    # takes the transposed layout.
    w1 = jax.random.normal(kw1, (C, C_RED), dtype=jnp.float32) * 0.1
    w2 = jax.random.normal(kw2, (C_RED, C), dtype=jnp.float32) * 0.1

    # Pure-JAX reference.
    y_ref = jnp.mean(x, axis=(2, 3))                      # (B, C)
    s_ref = jax.nn.sigmoid(jnp.maximum(y_ref @ w1, 0.0) @ w2)

    # Path 1: explicit identity (general SEBlock.forward(x, identity)).
    out = se_block(x, identity, w1, w2)
    jax.block_until_ready(out)
    ref = x * s_ref[:, :, None, None] + identity
    assert jnp.allclose(out, ref, atol=1e-5, rtol=1e-5), "mismatch (identity path)"

    # Path 2: identity is x -> deduplicated single-read kernel.
    out_self = se_block(x, None, w1, w2, identity_is_x=True)
    jax.block_until_ready(out_self)
    ref_self = x * s_ref[:, :, None, None] + x
    assert jnp.allclose(out_self, ref_self, atol=1e-5, rtol=1e-5), \
        "mismatch (self-residual path)"

    print("KERNEL_OK")
</pallas_src>

<mosaic_0001>
module attributes {stable_mosaic.version = 11 : i64} {
  func.func @_se_kernel_with_identity(%arg0: i32, %arg1: memref<2x64x256xf32, #tpu.memory_space<vmem>>, %arg2: memref<2x64x256xf32, #tpu.memory_space<vmem>>, %arg3: memref<64x4xf32, #tpu.memory_space<vmem>>, %arg4: memref<4x64xf32, #tpu.memory_space<vmem>>, %arg5: memref<2x64x256xf32, #tpu.memory_space<vmem>>) attributes {dimension_semantics = [#tpu.dimension_semantics<parallel>], iteration_bounds = array<i64: 4>, scalar_prefetch = 0 : i64, scratch_operands = 0 : i64, tpu.core_type = #tpu.core_type<tc>, window_params = [{transform_indices = @transform_0, window_bounds = array<i64: 2, 64, 256>}, {transform_indices = @transform_1, window_bounds = array<i64: 2, 64, 256>}, {pipeline_mode = #tpu.pipeline_mode<synchronous>, transform_indices = @transform_2, window_bounds = array<i64: 64, 4>}, {pipeline_mode = #tpu.pipeline_mode<synchronous>, transform_indices = @transform_3, window_bounds = array<i64: 4, 64>}, {transform_indices = @transform_4, window_bounds = array<i64: 2, 64, 256>}]} {
    %c0 = arith.constant 0 : index
    %c0_0 = arith.constant 0 : index
    %c0_1 = arith.constant 0 : index
    %0 = vector.load %arg1[%c0, %c0_0, %c0_1] : memref<2x64x256xf32, #tpu.memory_space<vmem>>, vector<2x64x256xf32>
    %cst = arith.constant dense<0.000000e+00> : vector<2x64xf32>
    %1 = vector.multi_reduction <add>, %0, %cst [2] : vector<2x64x256xf32> to vector<2x64xf32>
    %cst_2 = arith.constant 3.906250e-03 : f32
    %2 = vector.broadcast %cst_2 : f32 to vector<2x64xf32>
    %3 = arith.mulf %1, %2 : vector<2x64xf32>
    %c0_3 = arith.constant 0 : index
    %c0_4 = arith.constant 0 : index
    %4 = vector.load %arg3[%c0_3, %c0_4] : memref<64x4xf32, #tpu.memory_space<vmem>>, vector<64x4xf32>
    %c0_5 = arith.constant 0 : index
    %c0_6 = arith.constant 0 : index
    %5 = vector.load %arg4[%c0_5, %c0_6] : memref<4x64xf32, #tpu.memory_space<vmem>>, vector<4x64xf32>
    %cst_7 = arith.constant dense<0.000000e+00> : vector<2x4xf32>
    %6 = tpu.matmul %3, %4, %cst_7 {dimension_numbers = #tpu.dot_dimension_numbers<[1], [0], [0], [1], [0, 0, 1, 1], [], []>} : vector<2x64xf32>, vector<64x4xf32>, vector<2x4xf32> -> vector<2x4xf32>
    %cst_8 = arith.constant 0.000000e+00 : f32
    %7 = vector.broadcast %cst_8 : f32 to vector<2x4xf32>
    %8 = arith.maximumf %6, %7 : vector<2x4xf32>
    %cst_9 = arith.constant dense<0.000000e+00> : vector<2x64xf32>
    %9 = tpu.matmul %8, %5, %cst_9 {dimension_numbers = #tpu.dot_dimension_numbers<[1], [0], [0], [1], [0, 0, 1, 1], [], []>} : vector<2x4xf32>, vector<4x64xf32>, vector<2x64xf32> -> vector<2x64xf32>
    %10 = arith.negf %9 : vector<2x64xf32>
    %11 = math.exp %10 : vector<2x64xf32>
    %cst_10 = arith.constant 1.000000e+00 : f32
    %12 = vector.broadcast %cst_10 : f32 to vector<2x64xf32>
    %13 = arith.addf %12, %11 : vector<2x64xf32>
    %14 = arith.divf %12, %13 : vector<2x64xf32>
    %c0_11 = arith.constant 0 : index
    %c0_12 = arith.constant 0 : index
    %c0_13 = arith.constant 0 : index
    %15 = vector.load %arg1[%c0_11, %c0_12, %c0_13] : memref<2x64x256xf32, #tpu.memory_space<vmem>>, vector<2x64x256xf32>
    %16 = vector.shape_cast %14 : vector<2x64xf32> to vector<2x64x1xf32>
    %17 = vector.broadcast %16 : vector<2x64x1xf32> to vector<2x64x256xf32>
    %18 = arith.mulf %15, %17 : vector<2x64x256xf32>
    %c0_14 = arith.constant 0 : index
    %c0_15 = arith.constant 0 : index
    %c0_16 = arith.constant 0 : index
    %19 = vector.load %arg2[%c0_14, %c0_15, %c0_16] : memref<2x64x256xf32, #tpu.memory_space<vmem>>, vector<2x64x256xf32>
    %20 = arith.addf %18, %19 : vector<2x64x256xf32>
    %c0_17 = arith.constant 0 : index
    %c0_18 = arith.constant 0 : index
    %c0_19 = arith.constant 0 : index
    %21 = vector.load %arg5[%c0_17, %c0_18, %c0_19] : memref<2x64x256xf32, #tpu.memory_space<vmem>>, vector<2x64x256xf32>
    tpu.vector_store %arg5[%c0_17, %c0_18, %c0_19], %20 {strides = array<i32>} : memref<2x64x256xf32, #tpu.memory_space<vmem>>, vector<2x64x256xf32>,
    return
  }
  func.func @transform_0(%arg0: i32) -> (i32, i32, i32) {
    %c0_i32 = arith.constant 0 : i32
    %c0_i32_0 = arith.constant 0 : i32
    %c0_i32_1 = arith.constant 0 : i32
    return %arg0, %c0_i32, %c0_i32_0 : i32, i32, i32
  }
  func.func @transform_1(%arg0: i32) -> (i32, i32, i32) {
    %c0_i32 = arith.constant 0 : i32
    %c0_i32_0 = arith.constant 0 : i32
    %c0_i32_1 = arith.constant 0 : i32
    return %arg0, %c0_i32, %c0_i32_0 : i32, i32, i32
  }
  func.func @transform_2(%arg0: i32) -> (i32, i32) {
    %c0_i32 = arith.constant 0 : i32
    %c0_i32_0 = arith.constant 0 : i32
    %c0_i32_1 = arith.constant 0 : i32
    return %c0_i32, %c0_i32_0 : i32, i32
  }
  func.func @transform_3(%arg0: i32) -> (i32, i32) {
    %c0_i32 = arith.constant 0 : i32
    %c0_i32_0 = arith.constant 0 : i32
    %c0_i32_1 = arith.constant 0 : i32
    return %c0_i32, %c0_i32_0 : i32, i32
  }
  func.func @transform_4(%arg0: i32) -> (i32, i32, i32) {
    %c0_i32 = arith.constant 0 : i32
    %c0_i32_0 = arith.constant 0 : i32
    %c0_i32_1 = arith.constant 0 : i32
    return %arg0, %c0_i32, %c0_i32_0 : i32, i32, i32
  }
}

</mosaic_0001>

<llo_original>
// kernel: tpu_custom_call.1
$region0: #{tpu_custom_call.1}
  #allocation0 [shape = 'u32[]', space=smem, size = 0x4, offset = 0x4, fixed_abs, tag = 'smem constant byte address 0x4 - core index']
  #allocation1 [shape = 'u32[144,128]{1,0:T(1,128)}', space=vmem, size = 0x12000, scoped, tag = 'internal scratch']
  %s0 = inlined_call_operand.hbm [shape: f32[8,64,256], index: 0, kind: input, shape index: {}]
  %s1 = inlined_call_operand.hbm [shape: f32[8,64,256], index: 1, kind: input, shape index: {}]
  %s2 = inlined_call_operand.vmem [shape: f32[64,4], index: 2, kind: input, shape index: {}]
  %s3 = inlined_call_operand.vmem [shape: f32[4,64], index: 3, kind: input, shape index: {}]
  %s4 = inlined_call_operand.hbm [shape: f32[8,64,256], index: 4, kind: output, shape index: {}]
  %s5 = sld [smem:[#allocation0]]
  $region57: #{tpu_custom_call.1} parent=0
    _
  %s7 = ssub.s32 1, %s5
  %s8 = scalar_select 0, %s7, %s5
  $region1: #{tpu_custom_call.1} parent=0
    #allocation2 [shape = 'u8[262144]{0}', space=vmem, size = 0x40000, scoped, tag = 'input window, operand 0']
    #allocation3 [shape = 's32[2]{0}', space=sflag, size = 0x8, scoped, tag = 'scoped memory for tpu_custom_call.1']
    #allocation4 [shape = 's32[2]{0}', space=sflag, size = 0x8, scoped, tag = 'scoped memory for tpu_custom_call.1']
    #allocation5 [shape = 'u8[262144]{0}', space=vmem, size = 0x40000, scoped, tag = 'input window, operand 1']
    #allocation6 [shape = 's32[2]{0}', space=sflag, size = 0x8, scoped, tag = 'scoped memory for tpu_custom_call.1']
    #allocation7 [shape = 'u8[262144]{0}', space=vmem, size = 0x40000, scoped, tag = 'output window, operand 0']
    %9 = vsyncpa [#allocation3], 0
    %s10 = scalar_lea.sflag [#allocation3], 1
    %11 = vsyncpa %s10, 0
    %12 = vsyncpa [#allocation6], 0
    %s13 = scalar_lea.sflag [#allocation6], 1
    %14 = vsyncpa %s13, 0
    %15 = vsyncpa [#allocation4], 0
    %s16 = scalar_lea.sflag [#allocation4], 1
    %17 = vsyncpa %s16, 0
    loop: start=0, step=1, limit=6
    $region2: #{tpu_custom_call.1} parent=1 // loop_pre_header
      _
    $region3: #{tpu_custom_call.1} parent=1 // loop_header
      %s19 = sphi 0, %s23
      %p20 = scmp.ge.s32.totalorder %s19, 6
      %s29 = sphi 0, %s31
      %s32 = sphi 0, %s29
      %s33 = sphi 0, %s32
      %s49 = sphi 0, %s33
      %s55 = sphi 0, %s57
      %s58 = sphi 0, %s55
      %s59 = sphi 0, %s58
      %s75 = sphi 0, %s59
      %s79 = sphi 0, %s79
      %s81 = sphi 0, %s79
      %s82 = sphi 0, %s81
      %s96 = sphi 0, %s82
      %s100 = sphi 0, %s100
      %s102 = sphi 0, %s100
      %s103 = sphi 0, %s102
      %s117 = sphi 0, %s103
      %s123 = sphi 0, %s125
      %s126 = sphi 0, %s123
      %s127 = sphi 0, %s126
      %s143 = sphi 0, %s127
    $region4: #{tpu_custom_call.1} parent=1 // loop_header_branch
      %22 = sbr.rel (%p20) target = $region8
    $region5: #{tpu_custom_call.1} parent=1 // loop_body
      %s24 = ssub.s32 %s19, 1
      %s25 = ssub.s32 %s19, 2
      %s26 = sadd.s32 %s19, 1
      %s27 = ssub.s32 %s19, %s26
      %p28 = scmp.eq.s32.totalorder %s27, 0
      %s30 = sadd.s32 %s29, 1
      %s31 = scalar_select %p28, %s29, %s30
      %p34 = pneg %p28
      %p35 = scmp.eq.s32.totalorder %s19, 3
      %p36 = por %p34, %p35
      %p37 = scmp.ne.s32.totalorder %s29, %s32
      %p38 = scmp.eq.s32.totalorder %s19, 0
      %p39 = por %p37, %p38
      %p40 = scmp.ne.s32.totalorder %s29, %s32
      %p41 = scmp.eq.s32.totalorder %s24, 3
      %p42 = por %p40, %p41
      %p43 = scmp.ne.s32.totalorder %s32, %s33
      %p44 = scmp.eq.s32.totalorder %s24, 0
      %p45 = por %p43, %p44
      %p46 = scmp.ne.s32.totalorder %s32, %s33
      %p47 = scmp.eq.s32.totalorder %s25, 3
      %p48 = por %p46, %p47
      %p50 = scmp.ne.s32.totalorder %s33, %s49
      %p51 = scmp.eq.s32.totalorder %s25, 0
      %p52 = por %p50, %p51
      %s53 = ssub.s32 %s19, %s26
      %p54 = scmp.eq.s32.totalorder %s53, 0
      %s56 = sadd.s32 %s55, 1
      %s57 = scalar_select %p54, %s55, %s56
      %p60 = pneg %p54
      %p61 = scmp.eq.s32.totalorder %s19, 3
      %p62 = por %p60, %p61
      %p63 = scmp.ne.s32.totalorder %s55, %s58
      %p64 = scmp.eq.s32.totalorder %s19, 0
      %p65 = por %p63, %p64
      %p66 = scmp.ne.s32.totalorder %s55, %s58
      %p67 = scmp.eq.s32.totalorder %s24, 3
      %p68 = por %p66, %p67
      %p69 = scmp.ne.s32.totalorder %s58, %s59
      %p70 = scmp.eq.s32.totalorder %s24, 0
      %p71 = por %p69, %p70
      %p72 = scmp.ne.s32.totalorder %s58, %s59
      %p73 = scmp.eq.s32.totalorder %s25, 3
      %p74 = por %p72, %p73
      %p76 = scmp.ne.s32.totalorder %s59, %s75
      %p77 = scmp.eq.s32.totalorder %s25, 0
      %p78 = por %p76, %p77
      %s80 = sadd.s32 %s79, 1
      %p83 = scmp.eq.s32.totalorder %s19, 3
      %p84 = scmp.ne.s32.totalorder %s79, %s81
      %p85 = scmp.eq.s32.totalorder %s19, 0
      %p86 = por %p84, %p85
      %p87 = scmp.ne.s32.totalorder %s79, %s81
      %p88 = scmp.eq.s32.totalorder %s24, 3
      %p89 = por %p87, %p88
      %p90 = scmp.ne.s32.totalorder %s81, %s82
      %p91 = scmp.eq.s32.totalorder %s24, 0
      %p92 = por %p90, %p91
      %p93 = scmp.ne.s32.totalorder %s81, %s82
      %p94 = scmp.eq.s32.totalorder %s25, 3
      %p95 = por %p93, %p94
      %p97 = scmp.ne.s32.totalorder %s82, %s96
      %p98 = scmp.eq.s32.totalorder %s25, 0
      %p99 = por %p97, %p98
      %s101 = sadd.s32 %s100, 1
      %p104 = scmp.eq.s32.totalorder %s19, 3
      %p105 = scmp.ne.s32.totalorder %s100, %s102
      %p106 = scmp.eq.s32.totalorder %s19, 0
      %p107 = por %p105, %p106
      %p108 = scmp.ne.s32.totalorder %s100, %s102
      %p109 = scmp.eq.s32.totalorder %s24, 3
      %p110 = por %p108, %p109
      %p111 = scmp.ne.s32.totalorder %s102, %s103
      %p112 = scmp.eq.s32.totalorder %s24, 0
      %p113 = por %p111, %p112
      %p114 = scmp.ne.s32.totalorder %s102, %s103
      %p115 = scmp.eq.s32.totalorder %s25, 3
      %p116 = por %p114, %p115
      %p118 = scmp.ne.s32.totalorder %s103, %s117
      %p119 = scmp.eq.s32.totalorder %s25, 0
      %p120 = por %p118, %p119
      %s121 = ssub.s32 %s19, %s26
      %p122 = scmp.eq.s32.totalorder %s121, 0
      %s124 = sadd.s32 %s123, 1
      %s125 = scalar_select %p122, %s123, %s124
      %p128 = pneg %p122
      %p129 = scmp.eq.s32.totalorder %s19, 3
      %p130 = por %p128, %p129
      %p131 = scmp.ne.s32.totalorder %s123, %s126
      %p132 = scmp.eq.s32.totalorder %s19, 0
      %p133 = por %p131, %p132
      %p134 = scmp.ne.s32.totalorder %s123, %s126
      %p135 = scmp.eq.s32.totalorder %s24, 3
      %p136 = por %p134, %p135
      %p137 = scmp.ne.s32.totalorder %s126, %s127
      %p138 = scmp.eq.s32.totalorder %s24, 0
      %p139 = por %p137, %p138
      %p140 = scmp.ne.s32.totalorder %s126, %s127
      %p141 = scmp.eq.s32.totalorder %s25, 3
      %p142 = por %p140, %p141
      %p144 = scmp.ne.s32.totalorder %s127, %s143
      %p145 = scmp.eq.s32.totalorder %s25, 0
      %p146 = por %p144, %p145
      %p147 = scmp.le.s32.totalorder 1, %s19
      %p148 = scmp.lt.s32.totalorder %s19, 5
      %p149 = pnand %p147, %p148
      %p150 = pneg %p149
      // Predicated region
      $region9: #{tpu_custom_call.1} parent=5 // pred_check
        _
      $region10: #{tpu_custom_call.1} parent=5 // pred_check_branch
        %152 = sbr.rel (%p149) target = $region12
      $region11: #{tpu_custom_call.1} parent=5 // pred_region
        %s153 = ssub.s32 %s19, 1
        // Predicated region
        $region13: #{tpu_custom_call.1} parent=11 // pred_check
          %p154 = pneg %p92
        $region14: #{tpu_custom_call.1} parent=11 // pred_check_branch
          %156 = sbr.rel (%p154) target = $region16
        $region15: #{tpu_custom_call.1} parent=11 // pred_region
          _
        $region16: #{tpu_custom_call.1} parent=11 // pred_fallthru
          _
        // Predicated region
        $region17: #{tpu_custom_call.1} parent=11 // pred_check
          %p157 = pneg %p113
        $region18: #{tpu_custom_call.1} parent=11 // pred_check_branch
          %159 = sbr.rel (%p157) target = $region20
        $region19: #{tpu_custom_call.1} parent=11 // pred_region
          _
        $region20: #{tpu_custom_call.1} parent=11 // pred_fallthru
          _
      $region12: #{tpu_custom_call.1} parent=5 // pred_fallthru
        _
      %p160 = scmp.lt.s32.totalorder %s19, 4
      // Predicated region
      $region21: #{tpu_custom_call.1} parent=5 // pred_check
        %p161 = pneg %p160
      $region22: #{tpu_custom_call.1} parent=5 // pred_check_branch
        %163 = sbr.rel (%p161) target = $region24
      $region23: #{tpu_custom_call.1} parent=5 // pred_region
        // Predicated region
        $region25: #{tpu_custom_call.1} parent=23 // pred_check
          %p164 = pneg %p39
        $region26: #{tpu_custom_call.1} parent=23 // pred_check_branch
          %166 = sbr.rel (%p164) target = $region28
        $region27: #{tpu_custom_call.1} parent=23 // pred_region
          %s167 = sand.u32 %s29, 1
          %s168 = scalar_lea.sflag [#allocation3], %s167
          %s169 = sand.u32 %s29, 1
          %s170 = smul.addr %s169, 256
          %s171 = scalar_lea.vmem [#allocation2], %s170
          %s172 = smul.u32 2, %s19
          %s174 = ssub.s32 4096, 4096
          %175 = vsyncadd %s168, %s174
          %s176 = smul.addr %s172, 16
          %s177 = smul.addr %s176, 128
          %s178 = scalar_lea.hbm %s0, %s177
          %s179 = sshll.u32 %s171, 4
          %s180 = int_to_ptr.vmem [resolvable:$true] %s179
          %185 = dma.hbm_to_vmem [thread:$0]  %s178, 4096, %s180, %s168, 256, 256, 16
        $region28: #{tpu_custom_call.1} parent=23 // pred_fallthru
          _
        // Predicated region
        $region29: #{tpu_custom_call.1} parent=23 // pred_check
          %p186 = pneg %p65
        $region30: #{tpu_custom_call.1} parent=23 // pred_check_branch
          %188 = sbr.rel (%p186) target = $region32
        $region31: #{tpu_custom_call.1} parent=23 // pred_region
          %s189 = sand.u32 %s55, 1
          %s190 = scalar_lea.sflag [#allocation6], %s189
          %s191 = sand.u32 %s55, 1
          %s192 = smul.addr %s191, 256
          %s193 = scalar_lea.vmem [#allocation5], %s192
          %s194 = smul.u32 2, %s19
          %s196 = ssub.s32 4096, 4096
          %197 = vsyncadd %s190, %s196
          %s198 = smul.addr %s194, 16
          %s199 = smul.addr %s198, 128
          %s200 = scalar_lea.hbm %s1, %s199
          %s201 = sshll.u32 %s193, 4
          %s202 = int_to_ptr.vmem [resolvable:$true] %s201
          %207 = dma.hbm_to_vmem [thread:$0]  %s200, 4096, %s202, %s190, 256, 256, 16
        $region32: #{tpu_custom_call.1} parent=23 // pred_fallthru
          _
      $region24: #{tpu_custom_call.1} parent=5 // pred_fallthru
        _
      %p208 = scmp.le.s32.totalorder 1, %s19
      %p209 = scmp.lt.s32.totalorder %s19, 5
      %p210 = pnand %p208, %p209
      %p211 = pneg %p210
      // Predicated region
      $region33: #{tpu_custom_call.1} parent=5 // pred_check
        _
      $region34: #{tpu_custom_call.1} parent=5 // pred_check_branch
        %213 = sbr.rel (%p210) target = $region36
      $region35: #{tpu_custom_call.1} parent=5 // pred_region
        %s214 = ssub.s32 %s19, 1
        %s215 = sand.u32 %s32, 1
        %s216 = scalar_lea.sflag [#allocation3], %s215
        %s217 = sand.u32 %s32, 1
        %s218 = smul.addr %s217, 256
        %s219 = scalar_lea.vmem [#allocation2], %s218
        // Predicated region
        $region37: #{tpu_custom_call.1} parent=35 // pred_check
          %p220 = pneg %p45
        $region38: #{tpu_custom_call.1} parent=35 // pred_check_branch
          %222 = sbr.rel (%p220) target = $region40
        $region39: #{tpu_custom_call.1} parent=35 // pred_region
          %223 = dma.done %s216, 4096
        $region40: #{tpu_custom_call.1} parent=35 // pred_fallthru
          _
        %s224 = sand.u32 %s58, 1
        %s225 = scalar_lea.sflag [#allocation6], %s224
        %s226 = sand.u32 %s58, 1
        %s227 = smul.addr %s226, 256
        %s228 = scalar_lea.vmem [#allocation5], %s227
        // Predicated region
        $region41: #{tpu_custom_call.1} parent=35 // pred_check
          %p229 = pneg %p71
        $region42: #{tpu_custom_call.1} parent=35 // pred_check_branch
          %231 = sbr.rel (%p229) target = $region44
        $region43: #{tpu_custom_call.1} parent=35 // pred_region
          %232 = dma.done %s225, 4096
        $region44: #{tpu_custom_call.1} parent=35 // pred_fallthru
          _
        %s233 = sand.u32 %s32, 1
        %s234 = scalar_lea.sflag [#allocation3], %s233
        %s235 = sand.u32 %s32, 1
        %s236 = smul.addr %s235, 256
        %s237 = scalar_lea.vmem [#allocation2], %s236
        %p238 = pneg %p45
        %p239 = pneg %p42
        %s240 = sand.u32 %s58, 1
        %s241 = scalar_lea.sflag [#allocation6], %s240
        %s242 = sand.u32 %s58, 1
        %s243 = smul.addr %s242, 256
        %s244 = scalar_lea.vmem [#allocation5], %s243
        %p245 = pneg %p71
        %p246 = pneg %p68
        %p247 = pneg %p92
        %p248 = pneg %p89
        %p249 = pneg %p113
        %p250 = pneg %p110
        %p251 = pneg %p139
        %p252 = pneg %p136
        %s253 = sand.u32 %s126, 1
        %s254 = scalar_lea.sflag [#allocation4], %s253
        %s255 = sand.u32 %s126, 1
        %s256 = smul.addr %s255, 256
        %s257 = scalar_lea.vmem [#allocation7], %s256
        %s258 = smul.u32 2, %s24
        %s259 = smul.u32 2, %s24
        %s260 = smul.u32 2, %s24
        %v261 = vld [vmem:[%s219] sm:$0xff]
        %v262 = vld [vmem:[%s219 + $0x8] sm:$0xff]
        %v263 = vld [vmem:[%s219 + $0x10] sm:$0xff]
        %v264 = vld [vmem:[%s219 + $0x18] sm:$0xff]
        %v265 = vld [vmem:[%s219 + $0x20] sm:$0xff]
        %v266 = vld [vmem:[%s219 + $0x28] sm:$0xff]
        %v267 = vld [vmem:[%s219 + $0x30] sm:$0xff]
        %v268 = vld [vmem:[%s219 + $0x38] sm:$0xff]
        %v269 = vld [vmem:[%s219 + $0x40] sm:$0xff]
        %v270 = vld [vmem:[%s219 + $0x48] sm:$0xff]
        %v271 = vld [vmem:[%s219 + $0x50] sm:$0xff]
        %v272 = vld [vmem:[%s219 + $0x58] sm:$0xff]
        %v273 = vld [vmem:[%s219 + $0x60] sm:$0xff]
        %v274 = vld [vmem:[%s219 + $0x68] sm:$0xff]
        %v275 = vld [vmem:[%s219 + $0x70] sm:$0xff]
        %v276 = vld [vmem:[%s219 + $0x78] sm:$0xff]
        %v277 = vld [vmem:[%s219 + $0x80] sm:$0xff]
        %v278 = vld [vmem:[%s219 + $0x88] sm:$0xff]
        %v279 = vld [vmem:[%s219 + $0x90] sm:$0xff]
        %v280 = vld [vmem:[%s219 + $0x98] sm:$0xff]
        %v281 = vld [vmem:[%s219 + $0xa0] sm:$0xff]
        %v282 = vld [vmem:[%s219 + $0xa8] sm:$0xff]
        %v283 = vld [vmem:[%s219 + $0xb0] sm:$0xff]
        %v284 = vld [vmem:[%s219 + $0xb8] sm:$0xff]
        %v285 = vld [vmem:[%s219 + $0xc0] sm:$0xff]
        %v286 = vld [vmem:[%s219 + $0xc8] sm:$0xff]
        %v287 = vld [vmem:[%s219 + $0xd0] sm:$0xff]
        %v288 = vld [vmem:[%s219 + $0xd8] sm:$0xff]
        %v289 = vld [vmem:[%s219 + $0xe0] sm:$0xff]
        %v290 = vld [vmem:[%s219 + $0xe8] sm:$0xff]
        %v291 = vld [vmem:[%s219 + $0xf0] sm:$0xff]
        %v292 = vld [vmem:[%s219 + $0xf8] sm:$0xff]
        %v293 = vadd.f32 %v261, %v262
        %294 = vadd.xlane.f32.xlu0 %v293
        %v295 = vpop.xlane.xlu0 %294
        %v296 = vadd.f32 %v263, %v264
        %297 = vadd.xlane.f32.xlu0 %v296
        %v298 = vpop.xlane.xlu0 %297
        %v299 = vadd.f32 %v265, %v266
        %300 = vadd.xlane.f32.xlu0 %v299
        %v301 = vpop.xlane.xlu0 %300
        %v302 = vadd.f32 %v267, %v268
        %303 = vadd.xlane.f32.xlu0 %v302
        %v304 = vpop.xlane.xlu0 %303
        %v305 = vadd.f32 %v269, %v270
        %306 = vadd.xlane.f32.xlu0 %v305
        %v307 = vpop.xlane.xlu0 %306
        %v308 = vadd.f32 %v271, %v272
        %309 = vadd.xlane.f32.xlu0 %v308
        %v310 = vpop.xlane.xlu0 %309
        %v311 = vadd.f32 %v273, %v274
        %312 = vadd.xlane.f32.xlu0 %v311
        %v313 = vpop.xlane.xlu0 %312
        %v314 = vadd.f32 %v275, %v276
        %315 = vadd.xlane.f32.xlu0 %v314
        %v316 = vpop.xlane.xlu0 %315
        %v317 = vadd.f32 %v277, %v278
        %318 = vadd.xlane.f32.xlu0 %v317
        %v319 = vpop.xlane.xlu0 %318
        %v320 = vadd.f32 %v279, %v280
        %321 = vadd.xlane.f32.xlu0 %v320
        %v322 = vpop.xlane.xlu0 %321
        %v323 = vadd.f32 %v281, %v282
        %324 = vadd.xlane.f32.xlu0 %v323
        %v325 = vpop.xlane.xlu0 %324
        %v326 = vadd.f32 %v283, %v284
        %327 = vadd.xlane.f32.xlu0 %v326
        %v328 = vpop.xlane.xlu0 %327
        %v329 = vadd.f32 %v285, %v286
        %330 = vadd.xlane.f32.xlu0 %v329
        %v331 = vpop.xlane.xlu0 %330
        %v332 = vadd.f32 %v287, %v288
        %333 = vadd.xlane.f32.xlu0 %v332
        %v334 = vpop.xlane.xlu0 %333
        %v335 = vadd.f32 %v289, %v290
        %336 = vadd.xlane.f32.xlu0 %v335
        %v337 = vpop.xlane.xlu0 %336
        %v338 = vadd.f32 %v291, %v292
        %339 = vadd.xlane.f32.xlu0 %v338
        %v340 = vpop.xlane.xlu0 %339
        %v341 = vmul.f32 %v295, 0.00390625
        %v342 = vmul.f32 %v298, 0.00390625
        %v343 = vmul.f32 %v301, 0.00390625
        %v344 = vmul.f32 %v304, 0.00390625
        %v345 = vmul.f32 %v307, 0.00390625
        %v346 = vmul.f32 %v310, 0.00390625
        %v347 = vmul.f32 %v313, 0.00390625
        %v348 = vmul.f32 %v316, 0.00390625
        %v349 = vmul.f32 %v319, 0.00390625
        %v350 = vmul.f32 %v322, 0.00390625
        %v351 = vmul.f32 %v325, 0.00390625
        %v352 = vmul.f32 %v328, 0.00390625
        %v353 = vmul.f32 %v331, 0.00390625
        %v354 = vmul.f32 %v334, 0.00390625
        %v355 = vmul.f32 %v337, 0.00390625
        %v356 = vmul.f32 %v340, 0.00390625
        %v357 = vld [vmem:[%s2] sm:$0xff]
        %v358 = vld [vmem:[%s2 + $0x8] sm:$0xff]
        %v359 = vld [vmem:[%s2 + $0x10] sm:$0xff]
        %v360 = vld [vmem:[%s2 + $0x18] sm:$0xff]
        %v361 = vld [vmem:[%s2 + $0x20] sm:$0xff]
        %v362 = vld [vmem:[%s2 + $0x28] sm:$0xff]
        %v363 = vld [vmem:[%s2 + $0x30] sm:$0xff]
        %v364 = vld [vmem:[%s2 + $0x38] sm:$0xff]
        %v365 = vld [vmem:[%s3] sm:$0xf]
        %v382 = vlaneseq
        %v383 = vand.u32 %v382, 127
        %v384 = vlaneseq
        %v385 = vshrl.u32 %v384, 7
        %v386 = vsub.s32 %v383, %v385
        %v387 = vrot.slane %v341, %v386
        %v388 = vadd.s32 %v383, 4294967288
        %v389 = vlaneseq
        %v390 = vshrl.u32 %v389, 7
        %v391 = vsub.s32 %v388, %v390
        %v392 = vrot.slane %v342, %v391
        %vm393 = vcmask 130112
        %v394 = vsel %vm393, %v392, %v387
        %v395 = vadd.s32 %v383, 4294967280
        %v396 = vlaneseq
        %v397 = vshrl.u32 %v396, 7
        %v398 = vsub.s32 %v395, %v397
        %v399 = vrot.slane %v343, %v398
        %vm400 = vcmask 195712
        %v401 = vsel %vm400, %v399, %v394
        %v402 = vadd.s32 %v383, 4294967272
        %v403 = vlaneseq
        %v404 = vshrl.u32 %v403, 7
        %v405 = vsub.s32 %v402, %v404
        %v406 = vrot.slane %v344, %v405
        %vm407 = vcmask 261312
        %v408 = vsel %vm407, %v406, %v401
        %v409 = vadd.s32 %v383, 4294967264
        %v410 = vlaneseq
        %v411 = vshrl.u32 %v410, 7
        %v412 = vsub.s32 %v409, %v411
        %v413 = vrot.slane %v345, %v412
        %vm414 = vcmask 326912
        %v415 = vsel %vm414, %v413, %v408
        %v416 = vadd.s32 %v383, 4294967256
        %v417 = vlaneseq
        %v418 = vshrl.u32 %v417, 7
        %v419 = vsub.s32 %v416, %v418
        %v420 = vrot.slane %v346, %v419
        %vm421 = vcmask 392512
        %v422 = vsel %vm421, %v420, %v415
        %v423 = vadd.s32 %v383, 4294967248
        %v424 = vlaneseq
        %v425 = vshrl.u32 %v424, 7
        %v426 = vsub.s32 %v423, %v425
        %v427 = vrot.slane %v347, %v426
        %vm428 = vcmask 458112
        %v429 = vsel %vm428, %v427, %v422
        %v430 = vadd.s32 %v383, 4294967240
        %v431 = vlaneseq
        %v432 = vshrl.u32 %v431, 7
        %v433 = vsub.s32 %v430, %v432
        %v434 = vrot.slane %v348, %v433
        %vm435 = vcmask 523712
        %v436 = vsel %vm435, %v434, %v429
        %v437 = vlaneseq
        %v438 = vshrl.u32 %v437, 7
        %v439 = vsub.s32 %v383, %v438
        %v440 = vrot.slane %v349, %v439
        %v441 = vlaneseq
        %v442 = vshrl.u32 %v441, 7
        %v443 = vsub.s32 %v388, %v442
        %v444 = vrot.slane %v350, %v443
        %v445 = vsel %vm393, %v444, %v440
        %v446 = vlaneseq
        %v447 = vshrl.u32 %v446, 7
        %v448 = vsub.s32 %v395, %v447
        %v449 = vrot.slane %v351, %v448
        %v450 = vsel %vm400, %v449, %v445
        %v451 = vlaneseq
        %v452 = vshrl.u32 %v451, 7
        %v453 = vsub.s32 %v402, %v452
        %v454 = vrot.slane %v352, %v453
        %v455 = vsel %vm407, %v454, %v450
        %v456 = vlaneseq
        %v457 = vshrl.u32 %v456, 7
        %v458 = vsub.s32 %v409, %v457
        %v459 = vrot.slane %v353, %v458
        %v460 = vsel %vm414, %v459, %v455
        %v461 = vlaneseq
        %v462 = vshrl.u32 %v461, 7
        %v463 = vsub.s32 %v416, %v462
        %v464 = vrot.slane %v354, %v463
        %v465 = vsel %vm421, %v464, %v460
        %v466 = vlaneseq
        %v467 = vshrl.u32 %v466, 7
        %v468 = vsub.s32 %v423, %v467
        %v469 = vrot.slane %v355, %v468
        %v470 = vsel %vm428, %v469, %v465
        %v471 = vlaneseq
        %v472 = vshrl.u32 %v471, 7
        %v473 = vsub.s32 %v430, %v472
        %v474 = vrot.slane %v356, %v473
        %v475 = vsel %vm435, %v474, %v470
        %vm476 = vcmask 1041409
        %v477 = vsel %vm476, %v475, %v436
        %vm478 = vcmask 523264
        %v479 = vsel %vm478, %v477, 0
        %481 = vmatprep.subr.mxu0 0.0
        %482 = vmatpush1.msra.mxu0 %v357
        %483 = vmatprep.subr.mxu0 0.0
        %484 = vmatpush1.msra.mxu0 %v358
        %485 = vmatprep.subr.mxu0 0.0
        %486 = vmatpush1.msra.mxu0 %v359
        %487 = vmatprep.subr.mxu0 0.0
        %488 = vmatpush1.msra.mxu0 %v360
        %489 = vmatprep.subr.mxu0 0.0
        %490 = vmatpush1.msra.mxu0 %v361
        %491 = vmatprep.subr.mxu0 0.0
        %492 = vmatpush1.msra.mxu0 %v362
        %493 = vmatprep.subr.mxu0 0.0
        %494 = vmatpush1.msra.mxu0 %v363
        %495 = vmatprep.subr.mxu0 0.0
        %496 = vmatpush1.msra.mxu0 %v364
        %497 = vmatprep.subr.mxu0 0.0
        %498 = vmatpush1.msra.mxu0 0.0
        %499 = vmatprep.subr.mxu0 0.0
        %500 = vmatpush1.msra.mxu0 0.0
        %501 = vmatprep.subr.mxu0 0.0
        %502 = vmatpush1.msra.mxu0 0.0
        %503 = vmatprep.subr.mxu0 0.0
        %504 = vmatpush1.msra.mxu0 0.0
        %505 = vmatprep.subr.mxu0 0.0
        %506 = vmatpush1.msra.mxu0 0.0
        %507 = vmatprep.subr.mxu0 0.0
        %508 = vmatpush1.msra.mxu0 0.0
        %509 = vmatprep.subr.mxu0 0.0
        %510 = vmatpush1.msra.mxu0 0.0
        %511 = vmatprep.subr.mxu0 0.0
        %512 = vmatpush1.msra.mxu0 0.0
        %513 = vmatprep.subr.mxu0 0.0
        %514 = vmatpush1.msra.mxu0 0.0
        %515 = vmatprep.subr.mxu0 0.0
        %516 = vmatpush1.msra.mxu0 0.0
        %517 = vmatprep.subr.mxu0 0.0
        %518 = vmatpush1.msra.mxu0 0.0
        %519 = vmatprep.subr.mxu0 0.0
        %520 = vmatpush1.msra.mxu0 0.0
        %521 = vmatprep.subr.mxu0 0.0
        %522 = vmatpush1.msra.mxu0 0.0
        %523 = vmatprep.subr.mxu0 0.0
        %524 = vmatpush1.msra.mxu0 0.0
        %525 = vmatprep.subr.mxu0 0.0
        %526 = vmatpush1.msra.mxu0 0.0
        %527 = vmatprep.subr.mxu0 0.0
        %528 = vmatpush1.msra.mxu0 0.0
        %529 = vmatprep.subr.mxu0 0.0
        %530 = vmatpush1.msra.mxu0 0.0
        %531 = vmatprep.subr.mxu0 0.0
        %532 = vmatpush1.msra.mxu0 0.0
        %533 = vmatprep.subr.mxu0 0.0
        %534 = vmatpush1.msra.mxu0 0.0
        %535 = vmatprep.subr.mxu0 0.0
        %536 = vmatpush1.msra.mxu0 0.0
        %537 = vmatprep.subr.mxu0 0.0
        %538 = vmatpush1.msra.mxu0 0.0
        %539 = vmatprep.subr.mxu0 0.0
        %540 = vmatpush1.msra.mxu0 0.0
        %541 = vmatprep.subr.mxu0 0.0
        %542 = vmatpush1.msra.mxu0 0.0
        %543 = vmatprep.subr.mxu0 0.0
        %544 = vmatpush1.msra.mxu0 0.0
        %545 = vmatprep.mubr.f32.mxu0 0.0
        %546 = vmatmul.mubr.f32.gmra.mrb[0].mxu0 %v479
        %v547 = vpop.f32.mrb[0].mxu0
        %v548 = vadd.f32 0.0, %v547
        %v549 = vpop.f32.mrb[0].mxu0
        %550 = vdwg.mxu0
        %v551 = vmax.f32 %v548, 0.0
        %vm552 = vcmask 31744
        %v554 = vsel %vm552, %v551, 0
        %vm556 = vcmask 1043456
        %v558 = vsel %vm556, %v365, 0
        %560 = vmatprep.subr.mxu0 0.0
        %561 = vmatpush1.msra.mxu0 %v558
        %562 = vmatprep.subr.mxu0 0.0
        %563 = vmatpush1.msra.mxu0 0.0
        %564 = vmatprep.subr.mxu0 0.0
        %565 = vmatpush1.msra.mxu0 0.0
        %566 = vmatprep.subr.mxu0 0.0
        %567 = vmatpush1.msra.mxu0 0.0
        %568 = vmatprep.subr.mxu0 0.0
        %569 = vmatpush1.msra.mxu0 0.0
        %570 = vmatprep.subr.mxu0 0.0
        %571 = vmatpush1.msra.mxu0 0.0
        %572 = vmatprep.subr.mxu0 0.0
        %573 = vmatpush1.msra.mxu0 0.0
        %574 = vmatprep.subr.mxu0 0.0
        %575 = vmatpush1.msra.mxu0 0.0
        %576 = vmatprep.subr.mxu0 0.0
        %577 = vmatpush1.msra.mxu0 0.0
        %578 = vmatprep.subr.mxu0 0.0
        %579 = vmatpush1.msra.mxu0 0.0
        %580 = vmatprep.subr.mxu0 0.0
        %581 = vmatpush1.msra.mxu0 0.0
        %582 = vmatprep.subr.mxu0 0.0
        %583 = vmatpush1.msra.mxu0 0.0
        %584 = vmatprep.subr.mxu0 0.0
        %585 = vmatpush1.msra.mxu0 0.0
        %586 = vmatprep.subr.mxu0 0.0
        %587 = vmatpush1.msra.mxu0 0.0
        %588 = vmatprep.subr.mxu0 0.0
        %589 = vmatpush1.msra.mxu0 0.0
        %590 = vmatprep.subr.mxu0 0.0
        %591 = vmatpush1.msra.mxu0 0.0
        %592 = vmatprep.subr.mxu0 0.0
        %593 = vmatpush1.msra.mxu0 0.0
        %594 = vmatprep.subr.mxu0 0.0
        %595 = vmatpush1.msra.mxu0 0.0
        %596 = vmatprep.subr.mxu0 0.0
        %597 = vmatpush1.msra.mxu0 0.0
        %598 = vmatprep.subr.mxu0 0.0
        %599 = vmatpush1.msra.mxu0 0.0
        %600 = vmatprep.subr.mxu0 0.0
        %601 = vmatpush1.msra.mxu0 0.0
        %602 = vmatprep.subr.mxu0 0.0
        %603 = vmatpush1.msra.mxu0 0.0
        %604 = vmatprep.subr.mxu0 0.0
        %605 = vmatpush1.msra.mxu0 0.0
        %606 = vmatprep.subr.mxu0 0.0
        %607 = vmatpush1.msra.mxu0 0.0
        %608 = vmatprep.subr.mxu0 0.0
        %609 = vmatpush1.msra.mxu0 0.0
        %610 = vmatprep.subr.mxu0 0.0
        %611 = vmatpush1.msra.mxu0 0.0
        %612 = vmatprep.subr.mxu0 0.0
        %613 = vmatpush1.msra.mxu0 0.0
        %614 = vmatprep.subr.mxu0 0.0
        %615 = vmatpush1.msra.mxu0 0.0
        %616 = vmatprep.subr.mxu0 0.0
        %617 = vmatpush1.msra.mxu0 0.0
        %618 = vmatprep.subr.mxu0 0.0
        %619 = vmatpush1.msra.mxu0 0.0
        %620 = vmatprep.subr.mxu0 0.0
        %621 = vmatpush1.msra.mxu0 0.0
        %622 = vmatprep.subr.mxu0 0.0
        %623 = vmatpush1.msra.mxu0 0.0
        %624 = vmatprep.mubr.f32.mxu0 0.0
        %625 = vmatmul.mubr.f32.gmra.mrb[0].mxu0 %v554
        %v626 = vpop.f32.mrb[0].mxu0
        %v627 = vadd.f32 0.0, %v626
        %v628 = vpop.f32.mrb[0].mxu0
        %629 = vdwg.mxu0
        %v630 = vxor.u32 %v627, 2147483648
        %v631 = vmul.f32 %v630, 1.442695
        %v632 = vpow.pop %v631
        %v633 = vadd.f32 %v632, 1.0
        %v634 = vrcp.pop %v633
        %v635 = vmul.f32 1.0, %v634
        %v636 = vlaneseq
        %v637 = vshrl.u32 %v636, 7
        %v638 = vsub.s32 0, %v637
        %v639 = vrot.slane %v635, %v638
        %641 = vbcast.lane.b32.xlu0 %v639, 256
        %v642 = vpop.permute.xlu0 %641
        %s644 = sor.u32 256, 8
        %645 = vbcast.lane.b32.xlu0 %v639, %s644
        %v646 = vpop.permute.xlu0 %645
        %s648 = sor.u32 256, 16
        %649 = vbcast.lane.b32.xlu0 %v639, %s648
        %v650 = vpop.permute.xlu0 %649
        %s652 = sor.u32 256, 24
        %653 = vbcast.lane.b32.xlu0 %v639, %s652
        %v654 = vpop.permute.xlu0 %653
        %s656 = sor.u32 256, 32
        %657 = vbcast.lane.b32.xlu0 %v639, %s656
        %v658 = vpop.permute.xlu0 %657
        %s660 = sor.u32 256, 40
        %661 = vbcast.lane.b32.xlu0 %v639, %s660
        %v662 = vpop.permute.xlu0 %661
        %s664 = sor.u32 256, 48
        %665 = vbcast.lane.b32.xlu0 %v639, %s664
        %v666 = vpop.permute.xlu0 %665
        %s668 = sor.u32 256, 56
        %669 = vbcast.lane.b32.xlu0 %v639, %s668
        %v670 = vpop.permute.xlu0 %669
        %v671 = vlaneseq
        %v672 = vshrl.u32 %v671, 7
        %v673 = vsub.s32 1, %v672
        %v674 = vrot.slane %v635, %v673
        %676 = vbcast.lane.b32.xlu0 %v674, 256
        %v677 = vpop.permute.xlu0 %676
        %s679 = sor.u32 256, 8
        %680 = vbcast.lane.b32.xlu0 %v674, %s679
        %v681 = vpop.permute.xlu0 %680
        %s683 = sor.u32 256, 16
        %684 = vbcast.lane.b32.xlu0 %v674, %s683
        %v685 = vpop.permute.xlu0 %684
        %s687 = sor.u32 256, 24
        %688 = vbcast.lane.b32.xlu0 %v674, %s687
        %v689 = vpop.permute.xlu0 %688
        %s691 = sor.u32 256, 32
        %692 = vbcast.lane.b32.xlu0 %v674, %s691
        %v693 = vpop.permute.xlu0 %692
        %s695 = sor.u32 256, 40
        %696 = vbcast.lane.b32.xlu0 %v674, %s695
        %v697 = vpop.permute.xlu0 %696
        %s699 = sor.u32 256, 48
        %700 = vbcast.lane.b32.xlu0 %v674, %s699
        %v701 = vpop.permute.xlu0 %700
        %s703 = sor.u32 256, 56
        %704 = vbcast.lane.b32.xlu0 %v674, %s703
        %v705 = vpop.permute.xlu0 %704
        %v706 = vmul.f32 %v261, %v642
        %v707 = vmul.f32 %v262, %v642
        %v708 = vmul.f32 %v263, %v646
        %v709 = vmul.f32 %v264, %v646
        %v710 = vmul.f32 %v265, %v650
        %v711 = vmul.f32 %v266, %v650
        %v712 = vmul.f32 %v267, %v654
        %v713 = vmul.f32 %v268, %v654
        %v714 = vmul.f32 %v269, %v658
        %v715 = vmul.f32 %v270, %v658
        %v716 = vmul.f32 %v271, %v662
        %v717 = vmul.f32 %v272, %v662
        %v718 = vmul.f32 %v273, %v666
        %v719 = vmul.f32 %v274, %v666
        %v720 = vmul.f32 %v275, %v670
        %v721 = vmul.f32 %v276, %v670
        %v722 = vmul.f32 %v277, %v677
        %v723 = vmul.f32 %v278, %v677
        %v724 = vmul.f32 %v279, %v681
        %v725 = vmul.f32 %v280, %v681
        %v726 = vmul.f32 %v281, %v685
        %v727 = vmul.f32 %v282, %v685
        %v728 = vmul.f32 %v283, %v689
        %v729 = vmul.f32 %v284, %v689
        %v730 = vmul.f32 %v285, %v693
        %v731 = vmul.f32 %v286, %v693
        %v732 = vmul.f32 %v287, %v697
        %v733 = vmul.f32 %v288, %v697
        %v734 = vmul.f32 %v289, %v701
        %v735 = vmul.f32 %v290, %v701
        %v736 = vmul.f32 %v291, %v705
        %v737 = vmul.f32 %v292, %v705
        %v738 = vld [vmem:[%s228] sm:$0xff]
        %v739 = vld [vmem:[%s228 + $0x8] sm:$0xff]
        %v740 = vld [vmem:[%s228 + $0x10] sm:$0xff]
        %v741 = vld [vmem:[%s228 + $0x18] sm:$0xff]
        %v742 = vld [vmem:[%s228 + $0x20] sm:$0xff]
        %v743 = vld [vmem:[%s228 + $0x28] sm:$0xff]
        %v744 = vld [vmem:[%s228 + $0x30] sm:$0xff]
        %v745 = vld [vmem:[%s228 + $0x38] sm:$0xff]
        %v746 = vld [vmem:[%s228 + $0x40] sm:$0xff]
        %v747 = vld [vmem:[%s228 + $0x48] sm:$0xff]
        %v748 = vld [vmem:[%s228 + $0x50] sm:$0xff]
        %v749 = vld [vmem:[%s228 + $0x58] sm:$0xff]
        %v750 = vld [vmem:[%s228 + $0x60] sm:$0xff]
        %v751 = vld [vmem:[%s228 + $0x68] sm:$0xff]
        %v752 = vld [vmem:[%s228 + $0x70] sm:$0xff]
        %v753 = vld [vmem:[%s228 + $0x78] sm:$0xff]
        %v754 = vld [vmem:[%s228 + $0x80] sm:$0xff]
        %v755 = vld [vmem:[%s228 + $0x88] sm:$0xff]
        %v756 = vld [vmem:[%s228 + $0x90] sm:$0xff]
        %v757 = vld [vmem:[%s228 + $0x98] sm:$0xff]
        %v758 = vld [vmem:[%s228 + $0xa0] sm:$0xff]
        %v759 = vld [vmem:[%s228 + $0xa8] sm:$0xff]
        %v760 = vld [vmem:[%s228 + $0xb0] sm:$0xff]
        %v761 = vld [vmem:[%s228 + $0xb8] sm:$0xff]
        %v762 = vld [vmem:[%s228 + $0xc0] sm:$0xff]
        %v763 = vld [vmem:[%s228 + $0xc8] sm:$0xff]
        %v764 = vld [vmem:[%s228 + $0xd0] sm:$0xff]
        %v765 = vld [vmem:[%s228 + $0xd8] sm:$0xff]
        %v766 = vld [vmem:[%s228 + $0xe0] sm:$0xff]
        %v767 = vld [vmem:[%s228 + $0xe8] sm:$0xff]
        %v768 = vld [vmem:[%s228 + $0xf0] sm:$0xff]
        %v769 = vld [vmem:[%s228 + $0xf8] sm:$0xff]
        %v770 = vadd.f32 %v706, %v738
        %v771 = vadd.f32 %v707, %v739
        %v772 = vadd.f32 %v708, %v740
        %v773 = vadd.f32 %v709, %v741
        %v774 = vadd.f32 %v710, %v742
        %v775 = vadd.f32 %v711, %v743
        %v776 = vadd.f32 %v712, %v744
        %v777 = vadd.f32 %v713, %v745
        %v778 = vadd.f32 %v714, %v746
        %v779 = vadd.f32 %v715, %v747
        %v780 = vadd.f32 %v716, %v748
        %v781 = vadd.f32 %v717, %v749
        %v782 = vadd.f32 %v718, %v750
        %v783 = vadd.f32 %v719, %v751
        %v784 = vadd.f32 %v720, %v752
        %v785 = vadd.f32 %v721, %v753
        %v786 = vadd.f32 %v722, %v754
        %v787 = vadd.f32 %v723, %v755
        %v788 = vadd.f32 %v724, %v756
        %v789 = vadd.f32 %v725, %v757
        %v790 = vadd.f32 %v726, %v758
        %v791 = vadd.f32 %v727, %v759
        %v792 = vadd.f32 %v728, %v760
        %v793 = vadd.f32 %v729, %v761
        %v794 = vadd.f32 %v730, %v762
        %v795 = vadd.f32 %v731, %v763
        %v796 = vadd.f32 %v732, %v764
        %v797 = vadd.f32 %v733, %v765
        %v798 = vadd.f32 %v734, %v766
        %v799 = vadd.f32 %v735, %v767
        %v800 = vadd.f32 %v736, %v768
        %v801 = vadd.f32 %v737, %v769
        %802 = vst [vmem:[%s257] sm:$0xff] %v770
        %803 = vst [vmem:[%s257 + $0x8] sm:$0xff] %v771
        %804 = vst [vmem:[%s257 + $0x10] sm:$0xff] %v772
        %805 = vst [vmem:[%s257 + $0x18] sm:$0xff] %v773
        %806 = vst [vmem:[%s257 + $0x20] sm:$0xff] %v774
        %807 = vst [vmem:[%s257 + $0x28] sm:$0xff] %v775
        %808 = vst [vmem:[%s257 + $0x30] sm:$0xff] %v776
        %809 = vst [vmem:[%s257 + $0x38] sm:$0xff] %v777
        %810 = vst [vmem:[%s257 + $0x40] sm:$0xff] %v778
        %811 = vst [vmem:[%s257 + $0x48] sm:$0xff] %v779
        %812 = vst [vmem:[%s257 + $0x50] sm:$0xff] %v780
        %813 = vst [vmem:[%s257 + $0x58] sm:$0xff] %v781
        %814 = vst [vmem:[%s257 + $0x60] sm:$0xff] %v782
        %815 = vst [vmem:[%s257 + $0x68] sm:$0xff] %v783
        %816 = vst [vmem:[%s257 + $0x70] sm:$0xff] %v784
        %817 = vst [vmem:[%s257 + $0x78] sm:$0xff] %v785
        %818 = vst [vmem:[%s257 + $0x80] sm:$0xff] %v786
        %819 = vst [vmem:[%s257 + $0x88] sm:$0xff] %v787
        %820 = vst [vmem:[%s257 + $0x90] sm:$0xff] %v788
        %821 = vst [vmem:[%s257 + $0x98] sm:$0xff] %v789
        %822 = vst [vmem:[%s257 + $0xa0] sm:$0xff] %v790
        %823 = vst [vmem:[%s257 + $0xa8] sm:$0xff] %v791
        %824 = vst [vmem:[%s257 + $0xb0] sm:$0xff] %v792
        %825 = vst [vmem:[%s257 + $0xb8] sm:$0xff] %v793
        %826 = vst [vmem:[%s257 + $0xc0] sm:$0xff] %v794
        %827 = vst [vmem:[%s257 + $0xc8] sm:$0xff] %v795
        %828 = vst [vmem:[%s257 + $0xd0] sm:$0xff] %v796
        %829 = vst [vmem:[%s257 + $0xd8] sm:$0xff] %v797
        %830 = vst [vmem:[%s257 + $0xe0] sm:$0xff] %v798
        %831 = vst [vmem:[%s257 + $0xe8] sm:$0xff] %v799
        %832 = vst [vmem:[%s257 + $0xf0] sm:$0xff] %v800
        %833 = vst [vmem:[%s257 + $0xf8] sm:$0xff] %v801
        %s834 = sand.u32 %s126, 1
        %s835 = scalar_lea.sflag [#allocation4], %s834
        %s836 = sand.u32 %s126, 1
        %s837 = smul.addr %s836, 256
        %s838 = scalar_lea.vmem [#allocation7], %s837
        // Predicated region
        $region45: #{tpu_custom_call.1} parent=35 // pred_check
          %p839 = pneg %p136
        $region46: #{tpu_custom_call.1} parent=35 // pred_check_branch
          %841 = sbr.rel (%p839) target = $region48
        $region47: #{tpu_custom_call.1} parent=35 // pred_region
          %s842 = smul.u32 2, %s24
          %s844 = ssub.s32 4096, 4096
          %845 = vsyncadd %s835, %s844
          %s846 = smul.addr %s842, 16
          %s847 = smul.addr %s846, 128
          %s848 = scalar_lea.hbm %s4, %s847
          %s849 = sshll.u32 %s838, 4
          %s850 = int_to_ptr.vmem [resolvable:$true] %s849
          %855 = dma.vmem_to_hbm [thread:$0]  %s850, 4096, %s848, %s835, 256, 256, 16
        $region48: #{tpu_custom_call.1} parent=35 // pred_fallthru
          _
      $region36: #{tpu_custom_call.1} parent=5 // pred_fallthru
        _
      %p856 = scmp.le.s32.totalorder 2, %s19
      // Predicated region
      $region49: #{tpu_custom_call.1} parent=5 // pred_check
        %p857 = pneg %p856
      $region50: #{tpu_custom_call.1} parent=5 // pred_check_branch
        %859 = sbr.rel (%p857) target = $region52
      $region51: #{tpu_custom_call.1} parent=5 // pred_region
        %s860 = ssub.s32 %s19, 2
        // Predicated region
        $region53: #{tpu_custom_call.1} parent=51 // pred_check
          %p861 = pneg %p142
        $region54: #{tpu_custom_call.1} parent=51 // pred_check_branch
          %863 = sbr.rel (%p861) target = $region56
        $region55: #{tpu_custom_call.1} parent=51 // pred_region
          %s864 = sand.u32 %s127, 1
          %s865 = scalar_lea.sflag [#allocation4], %s864
          %s866 = sand.u32 %s127, 1
          %s867 = smul.addr %s866, 256
          %s868 = scalar_lea.vmem [#allocation7], %s867
          %869 = dma.done %s865, 4096
        $region56: #{tpu_custom_call.1} parent=51 // pred_fallthru
          _
      $region52: #{tpu_custom_call.1} parent=5 // pred_fallthru
        _
    $region6: #{tpu_custom_call.1} parent=1 // loop_footer
      %s23 = sadd.s32 1, %s19
    $region7: #{tpu_custom_call.1} parent=1 // loop_footer_branch
      %18 = sbr.rel target = $region3
    $region8: #{tpu_custom_call.1} parent=1 // loop_exit
      _
    %870 = vsyncpa [#allocation3], 1
    %s871 = scalar_lea.sflag [#allocation3], 1
    %872 = vsyncpa %s871, 1
    %873 = vsyncpa [#allocation6], 1
    %s874 = scalar_lea.sflag [#allocation6], 1
    %875 = vsyncpa %s874, 1
    %876 = vsyncpa [#allocation4], 1
    %s877 = scalar_lea.sflag [#allocation4], 1
    %878 = vsyncpa %s877, 1

</llo_original>
